<compile_context>
chip_gen: v6e
topology: v6e:2x2x1
jax: 0.10.0
libtpu: 0.0.40
codegen_flags: <defaults>
</compile_context>

<pallas_src>
import math

import jax
import jax.numpy as jnp
import numpy as np
from jax import lax
from jax.experimental import pallas as pl
from jax.experimental.pallas import tpu as pltpu

LOG_2PI = math.log(2.0 * math.pi)
PRIOR_MU_SIGMA = 10.0  # prior_mu_sigma = ones(D) * 10.0, prior_mu_mu = zeros(D)


def _round_up(x, m):
    return ((x + m - 1) // m) * m


def _make_kernel(N, K, D):
    ND, NK, KD = N * D, N * K, K * D
    KND = K * ND

    def kernel(scal_ref,
               x_ref, beta_ref,
               rw1_ref, b1t_ref, w2bd_ref, b2t_ref,
               gsum_ref, gbc_ref, exp_ref,
               out_ref):
        # SMEM scalars (scalar-prefetch): [radi, 1/sigma, log(sigma)+0.5*log(2pi)]
        radi = scal_ref[0]
        inv_sigma = scal_ref[1]
        log_norm = scal_ref[2]

        # ---- recon_mu MLP, lane-dense over the TB-sample block ---------------
        # h[t, n*H + j] = tanh(2*pi*beta[t,n]*w1[j] + b1[j])
        beta = beta_ref[...]                                               # (TB, N)
        h = jnp.tanh(jnp.dot(beta, rw1_ref[...],
                             preferred_element_type=jnp.float32) + b1t_ref[...])
        # out[t, n*D + d] = sum_j h[t,n,j] * w2[j,d] + b2[d]   (block-diag W2)
        out = jnp.dot(h, w2bd_ref[...],
                      preferred_element_type=jnp.float32) + b2t_ref[...]   # (TB, ND)

        # ---- L2 normalize each D-group ----------------------------------------
        # group-sum down to (TB, N), rsqrt * radi there, broadcast back via 0/1
        # matmul (8x less EUP work than rsqrt on the D-broadcast sumsq).
        sumsq_n = jnp.dot(out * out, gsum_ref[...],
                          preferred_element_type=jnp.float32)              # (TB, N)
        # tiny floor only guards padded rows (sliced off by the wrapper); real
        # rows have O(1) sumsq so results are unchanged.
        inv_scaled = lax.rsqrt(jnp.maximum(sumsq_n, 1e-30)) * radi
        scale_b = jnp.dot(inv_scaled, gbc_ref[...],
                          preferred_element_type=jnp.float32)              # (TB, ND)

        # ---- one-hot gather: mu_expand[t,n,d] = sum_k z[t,n,k]*mu[t,k,d] -------
        # single fused matmul of the packed [z|mu|ob] slab against a 0/1
        # block-diagonal expand matrix (ob rows are zero); split at lane KND
        # (vreg-aligned), then K lane-slice adds instead of a sum-over-k matmul.
        x = x_ref[...]                                                     # (TB, 128)
        zamb = jnp.dot(x, exp_ref[...],
                       preferred_element_type=jnp.float32)                 # (TB, 2*KND)
        za = zamb[:, :KND]
        mb = zamb[:, KND:]
        prod = za * mb                                                     # k-major
        mu_expand = prod[:, :ND]
        for k in range(1, K):
            mu_expand = mu_expand + prod[:, k * ND:(k + 1) * ND]

        recon = out * scale_b + mu_expand                                  # (TB, ND)

        # likelihood: Normal(recon_mu, sigma).log_prob(ob), elementwise
        ob = x[:, NK + KD:]                                                # (TB, ND)
        diff = (ob - recon) * inv_sigma
        loglik = -0.5 * (diff * diff) - log_norm

        # fused 128-lane output: [ recon | loglik ]
        out_ref[...] = jnp.concatenate([recon, loglik], axis=-1)

    return kernel


def _structural_constants(N, K, D, H):
    """Fixed 0/1 matrices that make the per-sample ops lane-dense matmuls."""
    ND, NH, NK, KD, KND = N * D, N * H, N * K, K * D, K * N * D
    # R[n, n*H + j] = 1        (repeat beta across the H columns of its block)
    R = np.zeros((N, NH), np.float32)
    for n in range(N):
        R[n, n * H:(n + 1) * H] = 1.0
    # group-sum (ND -> N) and broadcast-back (N -> ND) matrices
    Gsum = np.kron(np.eye(N, dtype=np.float32), np.ones((D, 1), np.float32))  # (ND, N)
    Gbc = np.kron(np.eye(N, dtype=np.float32), np.ones((1, D), np.float32))   # (N, ND)
    # Fused expand matrix for the packed [z | mu | ob] slab -> [za | mb]:
    #   za[t, k*ND + n*D + d] = z[t, n*K + k]
    #   mb[t, k*ND + n*D + d] = mu[t, k*D + d]
    # ob rows are left zero (free on the MXU, avoids slicing the LHS).
    E = np.zeros((NK + KD + ND, 2 * KND), np.float32)
    for k in range(K):
        for n in range(N):
            for d in range(D):
                E[n * K + k, k * ND + n * D + d] = 1.0
                E[NK + k * D + d, KND + k * ND + n * D + d] = 1.0
    return R, Gsum, Gbc, E


def _choose_tiling(SB, block_rows):
    """Pick (TB, SBp): big blocks, minimal padding, >=2 steps for v7x megacore."""
    nsteps = max(1, math.ceil(SB / block_rows))
    if nsteps == 1 and SB >= 64:
        nsteps = 2                      # v7x: give both TensorCores a block
    TB = _round_up(math.ceil(SB / nsteps), 8)
    nsteps = max(1, math.ceil(SB / TB))
    return TB, TB * nsteps


def decoder_forward(ob, mu, z, beta, params, block_rows=1024):
    S, B_, N, D = ob.shape
    K = z.shape[-1]
    H = params["w1"].shape[-1]
    SB = S * B_
    ND, KD, NK, NH, KND = N * D, K * D, N * K, N * H, K * N * D

    TB, SBp = _choose_tiling(SB, block_rows)

    # ---- pack inputs into one lane-dense slab [z | mu | ob] -------------------
    obf = jnp.asarray(ob, jnp.float32).reshape(SB, ND)
    muf = jnp.asarray(mu, jnp.float32).reshape(SB, KD)
    zf = jnp.asarray(z, jnp.float32).reshape(SB, NK)
    betaf = jnp.asarray(beta, jnp.float32).reshape(SB, N)
    packed = jnp.concatenate([zf, muf, obf], axis=-1)         # (SB, NK+KD+ND)
    if SBp != SB:
        packed = jnp.pad(packed, ((0, SBp - SB), (0, 0)))
        betaf = jnp.pad(betaf, ((0, SBp - SB), (0, 0)))
    lanes_in = NK + KD + ND

    # ---- fold learned weights into lane-dense structural matrices (tiny) ------
    R_np, Gsum_np, Gbc_np, E_np = _structural_constants(N, K, D, H)
    w1 = jnp.asarray(params["w1"], jnp.float32).reshape(H)
    b1 = jnp.asarray(params["b1"], jnp.float32).reshape(H)
    w2 = jnp.asarray(params["w2"], jnp.float32)                            # (H, D)
    b2 = jnp.asarray(params["b2"], jnp.float32).reshape(D)

    rw1 = jnp.asarray(R_np) * (2.0 * math.pi) * jnp.tile(w1, N)[None, :]   # (N, NH)
    b1t = jnp.tile(b1, N)[None, :]                                         # (1, NH)
    w2bd = jnp.kron(jnp.eye(N, dtype=jnp.float32), w2)                     # (NH, ND)
    b2t = jnp.tile(b2, N)[None, :]                                         # (1, ND)
    gsum = jnp.asarray(Gsum_np)                                            # (ND, N)
    gbc = jnp.asarray(Gbc_np)                                              # (N, ND)
    emat = jnp.asarray(E_np)                                               # (lanes_in, 2*KND)

    radi = jnp.asarray(params["radi"], jnp.float32).reshape(())
    sigma = jnp.asarray(params["sigma"], jnp.float32).reshape(())
    scal = jnp.stack([radi, 1.0 / sigma,
                      jnp.log(sigma) + 0.5 * LOG_2PI]).astype(jnp.float32)

    row_map = lambda i, s: (i, 0)     # noqa: E731  (s = scalar-prefetch ref)
    const_map = lambda i, s: (0, 0)   # noqa: E731

    fused = pl.pallas_call(
        _make_kernel(N, K, D),
        out_shape=jax.ShapeDtypeStruct((SBp, 2 * ND), jnp.float32),
        grid_spec=pltpu.PrefetchScalarGridSpec(
            num_scalar_prefetch=1,
            grid=(SBp // TB,),
            in_specs=[
                pl.BlockSpec((TB, lanes_in), row_map),   # packed [z|mu|ob]
                pl.BlockSpec((TB, N), row_map),          # beta
                pl.BlockSpec((N, NH), const_map),        # 2*pi*w1 repeat matrix
                pl.BlockSpec((1, NH), const_map),        # b1 tiled
                pl.BlockSpec((NH, ND), const_map),       # block-diag w2
                pl.BlockSpec((1, ND), const_map),        # b2 tiled
                pl.BlockSpec((ND, N), const_map),        # group-sum (ND -> N)
                pl.BlockSpec((N, ND), const_map),        # broadcast-back (N -> ND)
                pl.BlockSpec((lanes_in, 2 * KND), const_map),  # fused z/mu expand
            ],
            out_specs=pl.BlockSpec((TB, 2 * ND), row_map),
        ),
        compiler_params=pltpu.CompilerParams(
            dimension_semantics=("parallel",),
            vmem_limit_bytes=48 * 1024 * 1024),
    )(scal, packed, betaf, rw1, b1t, w2bd, b2t, gsum, gbc, emat)

    recon_mu = fused[:SB, :ND].reshape(S, B_, N, D)
    loglik = fused[:SB, ND:].reshape(S, B_, N, D)

    # Elementwise prior terms kept out of the kernel (no fusion benefit; removes
    # sub-128-lane masked-store output streams, per the perf review).
    muj = jnp.asarray(mu, jnp.float32)
    logmeans = (-0.5 * (muj / PRIOR_MU_SIGMA) ** 2
                - math.log(PRIOR_MU_SIGMA) - 0.5 * LOG_2PI)
    zf32 = jnp.asarray(z, jnp.float32)
    log_states = jnp.sum(zf32, axis=-1, keepdims=True) * (-math.log(float(K)))
    log_angles = jnp.zeros(beta.shape, jnp.float32)   # Beta(1,1) log-prob == 0

    return {
        "recon_mu": recon_mu,
        "log_likelihood": loglik,
        "log_means": logmeans,
        "log_states": log_states,
        "log_angles": log_angles,
    }


def init_params(key, D, num_hidden, recon_sigma):
    # Deterministic init mimicking torch Linear default (uniform +/- 1/sqrt(fan_in)).
    k1, k2, k3, k4 = jax.random.split(key, 4)
    bound1 = 1.0                       # fan_in = 1
    bound2 = 1.0 / math.sqrt(num_hidden)
    w1 = jax.random.uniform(k1, (1, num_hidden), jnp.float32, -bound1, bound1)
    b1 = jax.random.uniform(k2, (1, num_hidden), jnp.float32, -bound1, bound1)
    w2 = jax.random.uniform(k3, (num_hidden, D), jnp.float32, -bound2, bound2)
    b2 = jax.random.uniform(k4, (1, D), jnp.float32, -bound2, bound2)
    return {
        "w1": w1, "b1": b1, "w2": w2, "b2": b2,
        "radi": jnp.ones((1, 1), jnp.float32),                  # self.radi (Parameter)
        "sigma": jnp.full((1, 1), recon_sigma, jnp.float32),    # self.recon_sigma
    }


def decoder_reference(ob, mu, z, beta, params):
    # Pure-JAX reference mirroring the PyTorch forward.
    w1, b1, w2, b2 = params["w1"], params["b1"], params["w2"], params["b2"]
    radi, sigma = params["radi"][0, 0], params["sigma"][0, 0]
    x = beta * 2.0 * math.pi                                   # (S,B,N,1)
    h = jnp.tanh(jnp.einsum("sbni,ih->sbnh", x, w1) + b1[0])
    out = jnp.einsum("sbnh,hd->sbnd", h, w2) + b2[0]
    hidden2 = out / jnp.sqrt(jnp.sum(out ** 2, -1, keepdims=True))
    mu_expand = jnp.einsum("sbnk,sbkd->sbnd", z, mu)           # one-hot gather
    recon_mu = hidden2 * radi + mu_expand
    loglik = (-0.5 * ((ob - recon_mu) / sigma) ** 2
              - jnp.log(sigma) - 0.5 * LOG_2PI)
    logmeans = (-0.5 * (mu / PRIOR_MU_SIGMA) ** 2
                - math.log(PRIOR_MU_SIGMA) - 0.5 * LOG_2PI)
    K = z.shape[-1]
    logstates = jnp.sum(z, -1, keepdims=True) * (-math.log(float(K)))
    logangles = jnp.zeros_like(beta)
    return recon_mu, loglik, logmeans, logstates, logangles


def _check(out, ref):
    got = (out["recon_mu"], out["log_likelihood"], out["log_means"],
           out["log_states"], out["log_angles"])
    for g, r in zip(got, ref):
        np.testing.assert_allclose(np.asarray(g), np.asarray(r),
                                   rtol=2e-4, atol=2e-4)


if __name__ == "__main__":
    K, D, H = 4, 8, 32
    recon_sigma = 0.1

    key = jax.random.PRNGKey(0)
    kp, ko, km, kz, kb = jax.random.split(key, 5)
    params = init_params(kp, D, H, recon_sigma)

    def make_inputs(keys, S, B, N):
        ko_, km_, kz_, kb_ = keys
        ob = jax.random.normal(ko_, (S, B, N, D), jnp.float32)
        mu = jax.random.normal(km_, (S, B, K, D), jnp.float32)
        z_idx = jax.random.randint(kz_, (S, B, N), 0, K)
        z = jax.nn.one_hot(z_idx, K, dtype=jnp.float32)
        beta = jax.random.uniform(kb_, (S, B, N, 1), jnp.float32, 1e-3, 1.0 - 1e-3)
        return ob, mu, z, beta

    # Small shapes consistent with the module (single grid step).
    ob, mu, z, beta = make_inputs((ko, km, kz, kb), S=2, B=2, N=8)
    out = decoder_forward(ob, mu, z, beta, params)
    jax.block_until_ready(out)
    _check(out, decoder_reference(ob, mu, z, beta, params))

    # Multi-step grid + row-padding path (small block_rows override).
    keys2 = jax.random.split(jax.random.PRNGKey(1), 4)
    ob2, mu2, z2, beta2 = make_inputs(keys2, S=2, B=33, N=8)
    out2 = decoder_forward(ob2, mu2, z2, beta2, params, block_rows=32)
    jax.block_until_ready(out2)
    _check(out2, decoder_reference(ob2, mu2, z2, beta2, params))

    # Default block_rows with enough work to trigger the forced >=2-step
    # (v7x dual-TensorCore) path.
    keys3 = jax.random.split(jax.random.PRNGKey(2), 4)
    ob3, mu3, z3, beta3 = make_inputs(keys3, S=4, B=40, N=8)
    out3 = decoder_forward(ob3, mu3, z3, beta3, params)
    jax.block_until_ready(out3)
    _check(out3, decoder_reference(ob3, mu3, z3, beta3, params))

    # TODO(synk): probtorch.Trace itself (RNG/bookkeeping container) has no
    # Pallas equivalent; the kernel returns the trace's log-prob terms instead.
    print("KERNEL_OK")
</pallas_src>

<mosaic_0001>
module attributes {stable_mosaic.version = 11 : i64} {
  func.func @kernel(%arg0: i32, %arg1: memref<3xf32, #tpu.memory_space<smem>>, %arg2: memref<8x128xf32, #tpu.memory_space<vmem>>, %arg3: memref<8x8xf32, #tpu.memory_space<vmem>>, %arg4: memref<8x256xf32, #tpu.memory_space<vmem>>, %arg5: memref<1x256xf32, #tpu.memory_space<vmem>>, %arg6: memref<256x64xf32, #tpu.memory_space<vmem>>, %arg7: memref<1x64xf32, #tpu.memory_space<vmem>>, %arg8: memref<64x8xf32, #tpu.memory_space<vmem>>, %arg9: memref<8x64xf32, #tpu.memory_space<vmem>>, %arg10: memref<128x512xf32, #tpu.memory_space<vmem>>, %arg11: memref<8x128xf32, #tpu.memory_space<vmem>>) attributes {dimension_semantics = [#tpu.dimension_semantics<parallel>], iteration_bounds = array<i64: 1>, scalar_prefetch = 1 : i64, scratch_operands = 0 : i64, tpu.core_type = #tpu.core_type<tc>, window_params = [{transform_indices = @transform_0, window_bounds = array<i64: 8, 128>}, {transform_indices = @transform_1, window_bounds = array<i64: 8, 8>}, {pipeline_mode = #tpu.pipeline_mode<synchronous>, transform_indices = @transform_2, window_bounds = array<i64: 8, 256>}, {pipeline_mode = #tpu.pipeline_mode<synchronous>, transform_indices = @transform_3, window_bounds = array<i64: 1, 256>}, {pipeline_mode = #tpu.pipeline_mode<synchronous>, transform_indices = @transform_4, window_bounds = array<i64: 256, 64>}, {pipeline_mode = #tpu.pipeline_mode<synchronous>, transform_indices = @transform_5, window_bounds = array<i64: 1, 64>}, {pipeline_mode = #tpu.pipeline_mode<synchronous>, transform_indices = @transform_6, window_bounds = array<i64: 64, 8>}, {pipeline_mode = #tpu.pipeline_mode<synchronous>, transform_indices = @transform_7, window_bounds = array<i64: 8, 64>}, {pipeline_mode = #tpu.pipeline_mode<synchronous>, transform_indices = @transform_8, window_bounds = array<i64: 128, 512>}, {transform_indices = @transform_9, window_bounds = array<i64: 8, 128>}]} {
    %c0 = arith.constant 0 : index
    %0 = memref.load %arg1[%c0] : memref<3xf32, #tpu.memory_space<smem>>
    %c1 = arith.constant 1 : index
    %1 = memref.load %arg1[%c1] : memref<3xf32, #tpu.memory_space<smem>>
    %c2 = arith.constant 2 : index
    %2 = memref.load %arg1[%c2] : memref<3xf32, #tpu.memory_space<smem>>
    %c0_0 = arith.constant 0 : index
    %c0_1 = arith.constant 0 : index
    %3 = vector.load %arg3[%c0_0, %c0_1] : memref<8x8xf32, #tpu.memory_space<vmem>>, vector<8x8xf32>
    %c0_2 = arith.constant 0 : index
    %c0_3 = arith.constant 0 : index
    %4 = vector.load %arg4[%c0_2, %c0_3] : memref<8x256xf32, #tpu.memory_space<vmem>>, vector<8x256xf32>
    %cst = arith.constant dense<0.000000e+00> : vector<8x256xf32>
    %5 = tpu.matmul %3, %4, %cst {dimension_numbers = #tpu.dot_dimension_numbers<[1], [0], [0], [1], [0, 0, 1, 1], [], []>} : vector<8x8xf32>, vector<8x256xf32>, vector<8x256xf32> -> vector<8x256xf32>
    %c0_4 = arith.constant 0 : index
    %c0_5 = arith.constant 0 : index
    %6 = vector.load %arg5[%c0_4, %c0_5] : memref<1x256xf32, #tpu.memory_space<vmem>>, vector<1x256xf32>
    %7 = vector.broadcast %6 : vector<1x256xf32> to vector<8x256xf32>
    %8 = arith.addf %5, %7 : vector<8x256xf32>
    %9 = math.tanh %8 : vector<8x256xf32>
    %c0_6 = arith.constant 0 : index
    %c0_7 = arith.constant 0 : index
    %10 = vector.load %arg6[%c0_6, %c0_7] : memref<256x64xf32, #tpu.memory_space<vmem>>, vector<256x64xf32>
    %cst_8 = arith.constant dense<0.000000e+00> : vector<8x64xf32>
    %11 = tpu.matmul %9, %10, %cst_8 {dimension_numbers = #tpu.dot_dimension_numbers<[1], [0], [0], [1], [0, 0, 1, 1], [], []>} : vector<8x256xf32>, vector<256x64xf32>, vector<8x64xf32> -> vector<8x64xf32>
    %c0_9 = arith.constant 0 : index
    %c0_10 = arith.constant 0 : index
    %12 = vector.load %arg7[%c0_9, %c0_10] : memref<1x64xf32, #tpu.memory_space<vmem>>, vector<1x64xf32>
    %13 = vector.broadcast %12 : vector<1x64xf32> to vector<8x64xf32>
    %14 = arith.addf %11, %13 : vector<8x64xf32>
    %15 = arith.mulf %14, %14 : vector<8x64xf32>
    %c0_11 = arith.constant 0 : index
    %c0_12 = arith.constant 0 : index
    %16 = vector.load %arg8[%c0_11, %c0_12] : memref<64x8xf32, #tpu.memory_space<vmem>>, vector<64x8xf32>
    %cst_13 = arith.constant dense<0.000000e+00> : vector<8x8xf32>
    %17 = tpu.matmul %15, %16, %cst_13 {dimension_numbers = #tpu.dot_dimension_numbers<[1], [0], [0], [1], [0, 0, 1, 1], [], []>} : vector<8x64xf32>, vector<64x8xf32>, vector<8x8xf32> -> vector<8x8xf32>
    %cst_14 = arith.constant 1.000000e-30 : f32
    %18 = vector.broadcast %cst_14 : f32 to vector<8x8xf32>
    %19 = arith.maximumf %17, %18 : vector<8x8xf32>
    %20 = math.rsqrt %19 : vector<8x8xf32>
    %21 = vector.broadcast %0 : f32 to vector<8x8xf32>
    %22 = arith.mulf %20, %21 : vector<8x8xf32>
    %c0_15 = arith.constant 0 : index
    %c0_16 = arith.constant 0 : index
    %23 = vector.load %arg9[%c0_15, %c0_16] : memref<8x64xf32, #tpu.memory_space<vmem>>, vector<8x64xf32>
    %cst_17 = arith.constant dense<0.000000e+00> : vector<8x64xf32>
    %24 = tpu.matmul %22, %23, %cst_17 {dimension_numbers = #tpu.dot_dimension_numbers<[1], [0], [0], [1], [0, 0, 1, 1], [], []>} : vector<8x8xf32>, vector<8x64xf32>, vector<8x64xf32> -> vector<8x64xf32>
    %c0_18 = arith.constant 0 : index
    %c0_19 = arith.constant 0 : index
    %25 = vector.load %arg2[%c0_18, %c0_19] : memref<8x128xf32, #tpu.memory_space<vmem>>, vector<8x128xf32>
    %c0_20 = arith.constant 0 : index
    %c0_21 = arith.constant 0 : index
    %26 = vector.load %arg10[%c0_20, %c0_21] : memref<128x512xf32, #tpu.memory_space<vmem>>, vector<128x512xf32>
    %cst_22 = arith.constant dense<0.000000e+00> : vector<8x512xf32>
    %27 = tpu.matmul %25, %26, %cst_22 {dimension_numbers = #tpu.dot_dimension_numbers<[1], [0], [0], [1], [0, 0, 1, 1], [], []>} : vector<8x128xf32>, vector<128x512xf32>, vector<8x512xf32> -> vector<8x512xf32>
    %28 = vector.extract_strided_slice %27 {offsets = [0, 0], sizes = [8, 256], strides = [1, 1]} : vector<8x512xf32> to vector<8x256xf32>
    %29 = vector.extract_strided_slice %27 {offsets = [0, 256], sizes = [8, 256], strides = [1, 1]} : vector<8x512xf32> to vector<8x256xf32>
    %30 = arith.mulf %28, %29 : vector<8x256xf32>
    %31 = vector.extract_strided_slice %30 {offsets = [0, 0], sizes = [8, 64], strides = [1, 1]} : vector<8x256xf32> to vector<8x64xf32>
    %32 = vector.extract_strided_slice %30 {offsets = [0, 64], sizes = [8, 64], strides = [1, 1]} : vector<8x256xf32> to vector<8x64xf32>
    %33 = arith.addf %31, %32 : vector<8x64xf32>
    %34 = vector.extract_strided_slice %30 {offsets = [0, 128], sizes = [8, 64], strides = [1, 1]} : vector<8x256xf32> to vector<8x64xf32>
    %35 = arith.addf %33, %34 : vector<8x64xf32>
    %36 = vector.extract_strided_slice %30 {offsets = [0, 192], sizes = [8, 64], strides = [1, 1]} : vector<8x256xf32> to vector<8x64xf32>
    %37 = arith.addf %35, %36 : vector<8x64xf32>
    %38 = arith.mulf %14, %24 : vector<8x64xf32>
    %39 = arith.addf %38, %37 : vector<8x64xf32>
    %40 = vector.extract_strided_slice %25 {offsets = [0, 64], sizes = [8, 64], strides = [1, 1]} : vector<8x128xf32> to vector<8x64xf32>
    %41 = arith.subf %40, %39 : vector<8x64xf32>
    %42 = vector.broadcast %1 : f32 to vector<8x64xf32>
    %43 = arith.mulf %41, %42 : vector<8x64xf32>
    %44 = arith.mulf %43, %43 : vector<8x64xf32>
    %cst_23 = arith.constant -5.000000e-01 : f32
    %45 = vector.broadcast %cst_23 : f32 to vector<8x64xf32>
    %46 = arith.mulf %45, %44 : vector<8x64xf32>
    %47 = vector.broadcast %2 : f32 to vector<8x64xf32>
    %48 = arith.subf %46, %47 : vector<8x64xf32>
    %49 = tpu.concatenate %39, %48 in 1 : vector<8x64xf32>, vector<8x64xf32> -> vector<8x128xf32>
    %c0_24 = arith.constant 0 : index
    %c0_25 = arith.constant 0 : index
    %50 = vector.load %arg11[%c0_24, %c0_25] : memref<8x128xf32, #tpu.memory_space<vmem>>, vector<8x128xf32>
    tpu.vector_store %arg11[%c0_24, %c0_25], %49 {strides = array<i32>} : memref<8x128xf32, #tpu.memory_space<vmem>>, vector<8x128xf32>,
    return
  }
  func.func @transform_0(%arg0: i32, %arg1: memref<3xf32, #tpu.memory_space<smem>>) -> (i32, i32) {
    %c0_i32 = arith.constant 0 : i32
    %c0_i32_0 = arith.constant 0 : i32
    return %arg0, %c0_i32 : i32, i32
  }
  func.func @transform_1(%arg0: i32, %arg1: memref<3xf32, #tpu.memory_space<smem>>) -> (i32, i32) {
    %c0_i32 = arith.constant 0 : i32
    %c0_i32_0 = arith.constant 0 : i32
    return %arg0, %c0_i32 : i32, i32
  }
  func.func @transform_2(%arg0: i32, %arg1: memref<3xf32, #tpu.memory_space<smem>>) -> (i32, i32) {
    %c0_i32 = arith.constant 0 : i32
    %c0_i32_0 = arith.constant 0 : i32
    %c0_i32_1 = arith.constant 0 : i32
    return %c0_i32, %c0_i32_0 : i32, i32
  }
  func.func @transform_3(%arg0: i32, %arg1: memref<3xf32, #tpu.memory_space<smem>>) -> (i32, i32) {
    %c0_i32 = arith.constant 0 : i32
    %c0_i32_0 = arith.constant 0 : i32
    %c0_i32_1 = arith.constant 0 : i32
    return %c0_i32, %c0_i32_0 : i32, i32
  }
  func.func @transform_4(%arg0: i32, %arg1: memref<3xf32, #tpu.memory_space<smem>>) -> (i32, i32) {
    %c0_i32 = arith.constant 0 : i32
    %c0_i32_0 = arith.constant 0 : i32
    %c0_i32_1 = arith.constant 0 : i32
    return %c0_i32, %c0_i32_0 : i32, i32
  }
  func.func @transform_5(%arg0: i32, %arg1: memref<3xf32, #tpu.memory_space<smem>>) -> (i32, i32) {
    %c0_i32 = arith.constant 0 : i32
    %c0_i32_0 = arith.constant 0 : i32
    %c0_i32_1 = arith.constant 0 : i32
    return %c0_i32, %c0_i32_0 : i32, i32
  }
  func.func @transform_6(%arg0: i32, %arg1: memref<3xf32, #tpu.memory_space<smem>>) -> (i32, i32) {
    %c0_i32 = arith.constant 0 : i32
    %c0_i32_0 = arith.constant 0 : i32
    %c0_i32_1 = arith.constant 0 : i32
    return %c0_i32, %c0_i32_0 : i32, i32
  }
  func.func @transform_7(%arg0: i32, %arg1: memref<3xf32, #tpu.memory_space<smem>>) -> (i32, i32) {
    %c0_i32 = arith.constant 0 : i32
    %c0_i32_0 = arith.constant 0 : i32
    %c0_i32_1 = arith.constant 0 : i32
    return %c0_i32, %c0_i32_0 : i32, i32
  }
  func.func @transform_8(%arg0: i32, %arg1: memref<3xf32, #tpu.memory_space<smem>>) -> (i32, i32) {
    %c0_i32 = arith.constant 0 : i32
    %c0_i32_0 = arith.constant 0 : i32
    %c0_i32_1 = arith.constant 0 : i32
    return %c0_i32, %c0_i32_0 : i32, i32
  }
  func.func @transform_9(%arg0: i32, %arg1: memref<3xf32, #tpu.memory_space<smem>>) -> (i32, i32) {
    %c0_i32 = arith.constant 0 : i32
    %c0_i32_0 = arith.constant 0 : i32
    return %arg0, %c0_i32 : i32, i32
  }
}

</mosaic_0001>

<llo_original>
// kernel: tpu_custom_call.1
$region0: #{tpu_custom_call.1}
  #allocation0 [shape = 'u32[]', space=smem, size = 0x4, offset = 0x4, fixed_abs, tag = 'smem constant byte address 0x4 - core index']
  #allocation1 [shape = 'u32[144,128]{1,0:T(1,128)}', space=vmem, size = 0x12000, scoped, tag = 'internal scratch']
  #allocation2 [shape = 's32[1]{0}', space=sflag, size = 0x4, scoped, tag = 'scoped memory for tpu_custom_call.1']
  #allocation3 [shape = 'u8[512]{0}', space=smem, size = 0x200, scoped, tag = 'prefetched SMEM operand 0']
  %s0 = inlined_call_operand.vmem [shape: f32[3], index: 0, kind: input, shape index: {}]
  %s1 = inlined_call_operand.vmem [shape: f32[8,128], index: 1, kind: input, shape index: {}]
  %s2 = inlined_call_operand.vmem [shape: f32[8,8], index: 2, kind: input, shape index: {}]
  %s3 = inlined_call_operand.vmem [shape: f32[8,256], index: 3, kind: input, shape index: {}]
  %s4 = inlined_call_operand.vmem [shape: f32[1,256], index: 4, kind: input, shape index: {}]
  %s5 = inlined_call_operand.vmem [shape: f32[256,64], index: 5, kind: input, shape index: {}]
  %s6 = inlined_call_operand.vmem [shape: f32[1,64], index: 6, kind: input, shape index: {}]
  %s7 = inlined_call_operand.vmem [shape: f32[64,8], index: 7, kind: input, shape index: {}]
  %s8 = inlined_call_operand.vmem [shape: f32[8,64], index: 8, kind: input, shape index: {}]
  %s9 = inlined_call_operand.hbm [shape: f32[128,512], index: 9, kind: input, shape index: {}]
  %s10 = inlined_call_operand.hbm [shape: f32[8,128], index: 10, kind: output, shape index: {}]
  %s11 = sld [smem:[#allocation0]]
  $region50: #{tpu_custom_call.1} parent=0
    _
  %s13 = ssub.s32 1, %s11
  %s14 = scalar_select 0, %s13, %s11
  %s15 = sshll.u32 %s0, 4
  %s16 = int_to_ptr.vmem [resolvable:$true] %s15
  %18 = dma.vmem_to_smem %s16, 16, [#allocation3], [#allocation2]
  %19 = dma.done [#allocation2], 16
  %20 = sfence
  $region1: #{tpu_custom_call.1} parent=0
    #allocation4 [shape = 'u8[262144]{0}', space=vmem, size = 0x40000, scoped, tag = 'input window, operand 9, single buffered']
    #allocation5 [shape = 's32[1]{0}', space=sflag, size = 0x4, scoped, tag = 'scoped memory for tpu_custom_call.1']
    #allocation6 [shape = 's32[1]{0}', space=sflag, size = 0x4, scoped, tag = 'scoped memory for tpu_custom_call.1']
    #allocation7 [shape = 'u8[4096]{0}', space=vmem, size = 0x1000, scoped, tag = 'output window, operand 0, single buffered']
    %21 = vsyncpa [#allocation5], 0
    %22 = vsyncpa [#allocation6], 0
    // Predicated region
    $region2: #{tpu_custom_call.1} parent=1 // pred_check
      _
    $region3: #{tpu_custom_call.1} parent=1 // pred_check_branch
      %24 = sbr.rel (0) target = $region5
    $region4: #{tpu_custom_call.1} parent=1 // pred_region
      _
    $region5: #{tpu_custom_call.1} parent=1 // pred_fallthru
      _
    // Predicated region
    $region6: #{tpu_custom_call.1} parent=1 // pred_check
      _
    $region7: #{tpu_custom_call.1} parent=1 // pred_check_branch
      %26 = sbr.rel (0) target = $region9
    $region8: #{tpu_custom_call.1} parent=1 // pred_region
      _
    $region9: #{tpu_custom_call.1} parent=1 // pred_fallthru
      _
    // Predicated region
    $region10: #{tpu_custom_call.1} parent=1 // pred_check
      _
    $region11: #{tpu_custom_call.1} parent=1 // pred_check_branch
      %28 = sbr.rel (0) target = $region13
    $region12: #{tpu_custom_call.1} parent=1 // pred_region
      _
    $region13: #{tpu_custom_call.1} parent=1 // pred_fallthru
      _
    // Predicated region
    $region14: #{tpu_custom_call.1} parent=1 // pred_check
      _
    $region15: #{tpu_custom_call.1} parent=1 // pred_check_branch
      %30 = sbr.rel (0) target = $region17
    $region16: #{tpu_custom_call.1} parent=1 // pred_region
      _
    $region17: #{tpu_custom_call.1} parent=1 // pred_fallthru
      _
    // Predicated region
    $region18: #{tpu_custom_call.1} parent=1 // pred_check
      _
    $region19: #{tpu_custom_call.1} parent=1 // pred_check_branch
      %32 = sbr.rel (0) target = $region21
    $region20: #{tpu_custom_call.1} parent=1 // pred_region
      _
    $region21: #{tpu_custom_call.1} parent=1 // pred_fallthru
      _
    // Predicated region
    $region22: #{tpu_custom_call.1} parent=1 // pred_check
      _
    $region23: #{tpu_custom_call.1} parent=1 // pred_check_branch
      %34 = sbr.rel (0) target = $region25
    $region24: #{tpu_custom_call.1} parent=1 // pred_region
      _
    $region25: #{tpu_custom_call.1} parent=1 // pred_fallthru
      _
    // Predicated region
    $region26: #{tpu_custom_call.1} parent=1 // pred_check
      _
    $region27: #{tpu_custom_call.1} parent=1 // pred_check_branch
      %36 = sbr.rel (0) target = $region29
    $region28: #{tpu_custom_call.1} parent=1 // pred_region
      _
    $region29: #{tpu_custom_call.1} parent=1 // pred_fallthru
      _
    // Predicated region
    $region30: #{tpu_custom_call.1} parent=1 // pred_check
      _
    $region31: #{tpu_custom_call.1} parent=1 // pred_check_branch
      %38 = sbr.rel (0) target = $region33
    $region32: #{tpu_custom_call.1} parent=1 // pred_region
      _
    $region33: #{tpu_custom_call.1} parent=1 // pred_fallthru
      _
    // Predicated region
    $region34: #{tpu_custom_call.1} parent=1 // pred_check
      _
    $region35: #{tpu_custom_call.1} parent=1 // pred_check_branch
      %40 = sbr.rel (0) target = $region37
    $region36: #{tpu_custom_call.1} parent=1 // pred_region
      %s42 = ssub.s32 8192, 8192
      %43 = vsyncadd [#allocation5], %s42
      %s44 = sshll.u32 [#allocation4], 4
      %s45 = int_to_ptr.vmem [resolvable:$true] %s44
      %50 = dma.hbm_to_vmem [thread:$0]  %s9, 8192, %s45, [#allocation5], 512, 512, 32
    $region37: #{tpu_custom_call.1} parent=1 // pred_fallthru
      _
    // Predicated region
    $region38: #{tpu_custom_call.1} parent=1 // pred_check
      _
    $region39: #{tpu_custom_call.1} parent=1 // pred_check_branch
      %52 = sbr.rel (0) target = $region41
    $region40: #{tpu_custom_call.1} parent=1 // pred_region
      %53 = dma.done [#allocation5], 8192
    $region41: #{tpu_custom_call.1} parent=1 // pred_fallthru
      _
    %s54 = sld [smem:[#allocation3]]
    %s55 = sld [smem:[#allocation3 + $0x1]]
    %s56 = sld [smem:[#allocation3 + $0x2]]
    %v57 = vld [vmem:[%s2] sm:$0xff]
    %v58 = vld [vmem:[%s3] sm:$0xff]
    %v59 = vld [vmem:[%s3 + $0x8] sm:$0xff]
    %v60 = vld [vmem:[%s4] sm:$0x3]
    %v62 = vlaneseq
    %v63 = vshrl.u32 %v62, 7
    %v64 = vsub.s32 0, %v63
    %v65 = vrot.slane %v60, %v64
    %v66 = vlaneseq
    %v67 = vshrl.u32 %v66, 7
    %v68 = vsub.s32 1, %v67
    %v69 = vrot.slane %v60, %v68
    %vm72 = vcmask 64512
    %v74 = vsel %vm72, %v57, 0
    %76 = vmatprep.subr.mxu0 0.0
    %77 = vmatpush1.msra.mxu0 0.0
    %78 = vmatprep.subr.mxu0 0.0
    %79 = vmatpush1.msra.mxu0 0.0
    %80 = vmatprep.subr.mxu0 0.0
    %81 = vmatpush1.msra.mxu0 0.0
    %82 = vmatprep.subr.mxu0 0.0
    %83 = vmatpush1.msra.mxu0 0.0
    %84 = vmatprep.subr.mxu0 0.0
    %85 = vmatpush1.msra.mxu0 0.0
    %86 = vmatprep.subr.mxu0 0.0
    %87 = vmatpush1.msra.mxu0 0.0
    %88 = vmatprep.subr.mxu0 0.0
    %89 = vmatpush1.msra.mxu0 0.0
    %90 = vmatprep.subr.mxu0 0.0
    %91 = vmatpush1.msra.mxu0 0.0
    %92 = vmatprep.subr.mxu0 0.0
    %93 = vmatpush1.msra.mxu0 0.0
    %94 = vmatprep.subr.mxu0 0.0
    %95 = vmatpush1.msra.mxu0 0.0
    %96 = vmatprep.subr.mxu0 0.0
    %97 = vmatpush1.msra.mxu0 0.0
    %98 = vmatprep.subr.mxu0 0.0
    %99 = vmatpush1.msra.mxu0 0.0
    %100 = vmatprep.subr.mxu0 0.0
    %101 = vmatpush1.msra.mxu0 0.0
    %102 = vmatprep.subr.mxu0 0.0
    %103 = vmatpush1.msra.mxu0 0.0
    %104 = vmatprep.subr.mxu0 0.0
    %105 = vmatpush1.msra.mxu0 0.0
    %106 = vmatprep.subr.mxu0 %v59
    %107 = vmatpush1.msra.mxu0 %v58
    %108 = vmatprep.subr.mxu0 0.0
    %109 = vmatpush2.msra.mxu0 0.0
    %110 = vmatprep.subr.mxu0 0.0
    %111 = vmatpush2.msra.mxu0 0.0
    %112 = vmatprep.subr.mxu0 0.0
    %113 = vmatpush2.msra.mxu0 0.0
    %114 = vmatprep.subr.mxu0 0.0
    %115 = vmatpush2.msra.mxu0 0.0
    %116 = vmatprep.subr.mxu0 0.0
    %117 = vmatpush2.msra.mxu0 0.0
    %118 = vmatprep.subr.mxu0 0.0
    %119 = vmatpush2.msra.mxu0 0.0
    %120 = vmatprep.subr.mxu0 0.0
    %121 = vmatpush2.msra.mxu0 0.0
    %122 = vmatprep.subr.mxu0 0.0
    %123 = vmatpush2.msra.mxu0 0.0
    %124 = vmatprep.subr.mxu0 0.0
    %125 = vmatpush2.msra.mxu0 0.0
    %126 = vmatprep.subr.mxu0 0.0
    %127 = vmatpush2.msra.mxu0 0.0
    %128 = vmatprep.subr.mxu0 0.0
    %129 = vmatpush2.msra.mxu0 0.0
    %130 = vmatprep.subr.mxu0 0.0
    %131 = vmatpush2.msra.mxu0 0.0
    %132 = vmatprep.subr.mxu0 0.0
    %133 = vmatpush2.msra.mxu0 0.0
    %134 = vmatprep.subr.mxu0 0.0
    %135 = vmatpush2.msra.mxu0 0.0
    %136 = vmatprep.subr.mxu0 0.0
    %137 = vmatpush2.msra.mxu0 0.0
    %138 = vmatprep.subr.mxu0 0.0
    %139 = vmatpush2.msra.mxu0 0.0
    %140 = vmatprep.mubr.f32.mxu0 0.0
    %141 = vmatmul.mubr.f32.gmra.mxu0 %v74
    %v142 = vpop.f32.mrf.mxu0
    %v143 = vadd.f32 %v65, %v142
    %v144 = vpop.f32.mrf.mxu0
    %v145 = vadd.f32 %v69, %v144
    %146 = vdwg.mxu0
    %v147 = vtanh.pop %v143
    %v148 = vtanh.pop %v145
    %v149 = vld [vmem:[%s5] sm:$0xff]
    %v150 = vld [vmem:[%s5 + $0x8] sm:$0xff]
    %v151 = vld [vmem:[%s5 + $0x10] sm:$0xff]
    %v152 = vld [vmem:[%s5 + $0x18] sm:$0xff]
    %v153 = vld [vmem:[%s5 + $0x20] sm:$0xff]
    %v154 = vld [vmem:[%s5 + $0x28] sm:$0xff]
    %v155 = vld [vmem:[%s5 + $0x30] sm:$0xff]
    %v156 = vld [vmem:[%s5 + $0x38] sm:$0xff]
    %v157 = vld [vmem:[%s5 + $0x40] sm:$0xff]
    %v158 = vld [vmem:[%s5 + $0x48] sm:$0xff]
    %v159 = vld [vmem:[%s5 + $0x50] sm:$0xff]
    %v160 = vld [vmem:[%s5 + $0x58] sm:$0xff]
    %v161 = vld [vmem:[%s5 + $0x60] sm:$0xff]
    %v162 = vld [vmem:[%s5 + $0x68] sm:$0xff]
    %v163 = vld [vmem:[%s5 + $0x70] sm:$0xff]
    %v164 = vld [vmem:[%s5 + $0x78] sm:$0xff]
    %v165 = vld [vmem:[%s5 + $0x80] sm:$0xff]
    %v166 = vld [vmem:[%s5 + $0x88] sm:$0xff]
    %v167 = vld [vmem:[%s5 + $0x90] sm:$0xff]
    %v168 = vld [vmem:[%s5 + $0x98] sm:$0xff]
    %v169 = vld [vmem:[%s5 + $0xa0] sm:$0xff]
    %v170 = vld [vmem:[%s5 + $0xa8] sm:$0xff]
    %v171 = vld [vmem:[%s5 + $0xb0] sm:$0xff]
    %v172 = vld [vmem:[%s5 + $0xb8] sm:$0xff]
    %v173 = vld [vmem:[%s5 + $0xc0] sm:$0xff]
    %v174 = vld [vmem:[%s5 + $0xc8] sm:$0xff]
    %v175 = vld [vmem:[%s5 + $0xd0] sm:$0xff]
    %v176 = vld [vmem:[%s5 + $0xd8] sm:$0xff]
    %v177 = vld [vmem:[%s5 + $0xe0] sm:$0xff]
    %v178 = vld [vmem:[%s5 + $0xe8] sm:$0xff]
    %v179 = vld [vmem:[%s5 + $0xf0] sm:$0xff]
    %v180 = vld [vmem:[%s5 + $0xf8] sm:$0xff]
    %v181 = vld [vmem:[%s6] sm:$0x1]
    %v183 = vlaneseq
    %v184 = vshrl.u32 %v183, 7
    %v185 = vsub.s32 0, %v184
    %v186 = vrot.slane %v181, %v185
    %188 = vmatprep.subr.mxu0 0.0
    %189 = vmatpush1.msra.mxu0 %v164
    %190 = vmatprep.subr.mxu0 0.0
    %191 = vmatpush1.msra.mxu0 %v163
    %192 = vmatprep.subr.mxu0 0.0
    %193 = vmatpush1.msra.mxu0 %v162
    %194 = vmatprep.subr.mxu0 0.0
    %195 = vmatpush1.msra.mxu0 %v161
    %196 = vmatprep.subr.mxu0 0.0
    %197 = vmatpush1.msra.mxu0 %v160
    %198 = vmatprep.subr.mxu0 0.0
    %199 = vmatpush1.msra.mxu0 %v159
    %200 = vmatprep.subr.mxu0 0.0
    %201 = vmatpush1.msra.mxu0 %v158
    %202 = vmatprep.subr.mxu0 0.0
    %203 = vmatpush1.msra.mxu0 %v157
    %204 = vmatprep.subr.mxu0 0.0
    %205 = vmatpush1.msra.mxu0 %v156
    %206 = vmatprep.subr.mxu0 0.0
    %207 = vmatpush1.msra.mxu0 %v155
    %208 = vmatprep.subr.mxu0 0.0
    %209 = vmatpush1.msra.mxu0 %v154
    %210 = vmatprep.subr.mxu0 0.0
    %211 = vmatpush1.msra.mxu0 %v153
    %212 = vmatprep.subr.mxu0 0.0
    %213 = vmatpush1.msra.mxu0 %v152
    %214 = vmatprep.subr.mxu0 0.0
    %215 = vmatpush1.msra.mxu0 %v151
    %216 = vmatprep.subr.mxu0 0.0
    %217 = vmatpush1.msra.mxu0 %v150
    %218 = vmatprep.subr.mxu0 0.0
    %219 = vmatpush1.msra.mxu0 %v149
    %220 = vmatprep.subr.mxu0 0.0
    %221 = vmatpush2.msra.mxu0 %v180
    %222 = vmatprep.subr.mxu0 0.0
    %223 = vmatpush2.msra.mxu0 %v179
    %224 = vmatprep.subr.mxu0 0.0
    %225 = vmatpush2.msra.mxu0 %v178
    %226 = vmatprep.subr.mxu0 0.0
    %227 = vmatpush2.msra.mxu0 %v177
    %228 = vmatprep.subr.mxu0 0.0
    %229 = vmatpush2.msra.mxu0 %v176
    %230 = vmatprep.subr.mxu0 0.0
    %231 = vmatpush2.msra.mxu0 %v175
    %232 = vmatprep.subr.mxu0 0.0
    %233 = vmatpush2.msra.mxu0 %v174
    %234 = vmatprep.subr.mxu0 0.0
    %235 = vmatpush2.msra.mxu0 %v173
    %236 = vmatprep.subr.mxu0 0.0
    %237 = vmatpush2.msra.mxu0 %v172
    %238 = vmatprep.subr.mxu0 0.0
    %239 = vmatpush2.msra.mxu0 %v171
    %240 = vmatprep.subr.mxu0 0.0
    %241 = vmatpush2.msra.mxu0 %v170
    %242 = vmatprep.subr.mxu0 0.0
    %243 = vmatpush2.msra.mxu0 %v169
    %244 = vmatprep.subr.mxu0 0.0
    %245 = vmatpush2.msra.mxu0 %v168
    %246 = vmatprep.subr.mxu0 0.0
    %247 = vmatpush2.msra.mxu0 %v167
    %248 = vmatprep.subr.mxu0 0.0
    %249 = vmatpush2.msra.mxu0 %v166
    %250 = vmatprep.subr.mxu0 0.0
    %251 = vmatpush2.msra.mxu0 %v165
    %252 = vmatprep.mubr.f32.mxu0 %v148
    %253 = vmatmul.mubr.f32.gmra.mxu0 %v147
    %v254 = vpop.f32.mrf.mxu0
    %v255 = vadd.f32 %v186, %v254
    %v256 = vpop.f32.mrf.mxu0
    %257 = vdwg.mxu0
    %v258 = vmul.f32 %v255, %v255
    %v259 = vld [vmem:[%s7] sm:$0xff]
    %v260 = vld [vmem:[%s7 + $0x8] sm:$0xff]
    %v261 = vld [vmem:[%s7 + $0x10] sm:$0xff]
    %v262 = vld [vmem:[%s7 + $0x18] sm:$0xff]
    %v263 = vld [vmem:[%s7 + $0x20] sm:$0xff]
    %v264 = vld [vmem:[%s7 + $0x28] sm:$0xff]
    %v265 = vld [vmem:[%s7 + $0x30] sm:$0xff]
    %v266 = vld [vmem:[%s7 + $0x38] sm:$0xff]
    %vm267 = vcmask 523264
    %v269 = vsel %vm267, %v258, 0
    %271 = vmatprep.subr.mxu0 0.0
    %272 = vmatpush1.msra.mxu0 0.0
    %273 = vmatprep.subr.mxu0 0.0
    %274 = vmatpush1.msra.mxu0 0.0
    %275 = vmatprep.subr.mxu0 0.0
    %276 = vmatpush1.msra.mxu0 0.0
    %277 = vmatprep.subr.mxu0 0.0
    %278 = vmatpush1.msra.mxu0 0.0
    %279 = vmatprep.subr.mxu0 0.0
    %280 = vmatpush1.msra.mxu0 0.0
    %281 = vmatprep.subr.mxu0 0.0
    %282 = vmatpush1.msra.mxu0 0.0
    %283 = vmatprep.subr.mxu0 0.0
    %284 = vmatpush1.msra.mxu0 0.0
    %285 = vmatprep.subr.mxu0 0.0
    %286 = vmatpush1.msra.mxu0 0.0
    %287 = vmatprep.subr.mxu0 0.0
    %288 = vmatpush1.msra.mxu0 %v266
    %289 = vmatprep.subr.mxu0 0.0
    %290 = vmatpush1.msra.mxu0 %v265
    %291 = vmatprep.subr.mxu0 0.0
    %292 = vmatpush1.msra.mxu0 %v264
    %293 = vmatprep.subr.mxu0 0.0
    %294 = vmatpush1.msra.mxu0 %v263
    %295 = vmatprep.subr.mxu0 0.0
    %296 = vmatpush1.msra.mxu0 %v262
    %297 = vmatprep.subr.mxu0 0.0
    %298 = vmatpush1.msra.mxu0 %v261
    %299 = vmatprep.subr.mxu0 0.0
    %300 = vmatpush1.msra.mxu0 %v260
    %301 = vmatprep.subr.mxu0 0.0
    %302 = vmatpush1.msra.mxu0 %v259
    %303 = vmatprep.subr.mxu0 0.0
    %304 = vmatpush2.msra.mxu0 0.0
    %305 = vmatprep.subr.mxu0 0.0
    %306 = vmatpush2.msra.mxu0 0.0
    %307 = vmatprep.subr.mxu0 0.0
    %308 = vmatpush2.msra.mxu0 0.0
    %309 = vmatprep.subr.mxu0 0.0
    %310 = vmatpush2.msra.mxu0 0.0
    %311 = vmatprep.subr.mxu0 0.0
    %312 = vmatpush2.msra.mxu0 0.0
    %313 = vmatprep.subr.mxu0 0.0
    %314 = vmatpush2.msra.mxu0 0.0
    %315 = vmatprep.subr.mxu0 0.0
    %316 = vmatpush2.msra.mxu0 0.0
    %317 = vmatprep.subr.mxu0 0.0
    %318 = vmatpush2.msra.mxu0 0.0
    %319 = vmatprep.subr.mxu0 0.0
    %320 = vmatpush2.msra.mxu0 0.0
    %321 = vmatprep.subr.mxu0 0.0
    %322 = vmatpush2.msra.mxu0 0.0
    %323 = vmatprep.subr.mxu0 0.0
    %324 = vmatpush2.msra.mxu0 0.0
    %325 = vmatprep.subr.mxu0 0.0
    %326 = vmatpush2.msra.mxu0 0.0
    %327 = vmatprep.subr.mxu0 0.0
    %328 = vmatpush2.msra.mxu0 0.0
    %329 = vmatprep.subr.mxu0 0.0
    %330 = vmatpush2.msra.mxu0 0.0
    %331 = vmatprep.subr.mxu0 0.0
    %332 = vmatpush2.msra.mxu0 0.0
    %333 = vmatprep.subr.mxu0 0.0
    %334 = vmatpush2.msra.mxu0 0.0
    %335 = vmatprep.mubr.f32.mxu0 0.0
    %336 = vmatmul.mubr.f32.gmra.mxu0 %v269
    %v337 = vpop.f32.mrf.mxu0
    %v338 = vadd.f32 0.0, %v337
    %v339 = vpop.f32.mrf.mxu0
    %340 = vdwg.mxu0
    %v341 = vmax.f32 %v338, 1e-30
    %v342 = vrsqrt.pop %v341
    %v343 = vstv %s54
    %v344 = vmul.f32 %v342, %v343
    %v345 = vld [vmem:[%s8] sm:$0xff]
    %v347 = vsel %vm72, %v344, 0
    %349 = vmatprep.subr.mxu0 0.0
    %350 = vmatpush1.msra.mxu0 0.0
    %351 = vmatprep.subr.mxu0 0.0
    %352 = vmatpush1.msra.mxu0 0.0
    %353 = vmatprep.subr.mxu0 0.0
    %354 = vmatpush1.msra.mxu0 0.0
    %355 = vmatprep.subr.mxu0 0.0
    %356 = vmatpush1.msra.mxu0 0.0
    %357 = vmatprep.subr.mxu0 0.0
    %358 = vmatpush1.msra.mxu0 0.0
    %359 = vmatprep.subr.mxu0 0.0
    %360 = vmatpush1.msra.mxu0 0.0
    %361 = vmatprep.subr.mxu0 0.0
    %362 = vmatpush1.msra.mxu0 0.0
    %363 = vmatprep.subr.mxu0 0.0
    %364 = vmatpush1.msra.mxu0 0.0
    %365 = vmatprep.subr.mxu0 0.0
    %366 = vmatpush1.msra.mxu0 0.0
    %367 = vmatprep.subr.mxu0 0.0
    %368 = vmatpush1.msra.mxu0 0.0
    %369 = vmatprep.subr.mxu0 0.0
    %370 = vmatpush1.msra.mxu0 0.0
    %371 = vmatprep.subr.mxu0 0.0
    %372 = vmatpush1.msra.mxu0 0.0
    %373 = vmatprep.subr.mxu0 0.0
    %374 = vmatpush1.msra.mxu0 0.0
    %375 = vmatprep.subr.mxu0 0.0
    %376 = vmatpush1.msra.mxu0 0.0
    %377 = vmatprep.subr.mxu0 0.0
    %378 = vmatpush1.msra.mxu0 0.0
    %379 = vmatprep.subr.mxu0 0.0
    %380 = vmatpush1.msra.mxu0 %v345
    %381 = vmatprep.subr.mxu0 0.0
    %382 = vmatpush2.msra.mxu0 0.0
    %383 = vmatprep.subr.mxu0 0.0
    %384 = vmatpush2.msra.mxu0 0.0
    %385 = vmatprep.subr.mxu0 0.0
    %386 = vmatpush2.msra.mxu0 0.0
    %387 = vmatprep.subr.mxu0 0.0
    %388 = vmatpush2.msra.mxu0 0.0
    %389 = vmatprep.subr.mxu0 0.0
    %390 = vmatpush2.msra.mxu0 0.0
    %391 = vmatprep.subr.mxu0 0.0
    %392 = vmatpush2.msra.mxu0 0.0
    %393 = vmatprep.subr.mxu0 0.0
    %394 = vmatpush2.msra.mxu0 0.0
    %395 = vmatprep.subr.mxu0 0.0
    %396 = vmatpush2.msra.mxu0 0.0
    %397 = vmatprep.subr.mxu0 0.0
    %398 = vmatpush2.msra.mxu0 0.0
    %399 = vmatprep.subr.mxu0 0.0
    %400 = vmatpush2.msra.mxu0 0.0
    %401 = vmatprep.subr.mxu0 0.0
    %402 = vmatpush2.msra.mxu0 0.0
    %403 = vmatprep.subr.mxu0 0.0
    %404 = vmatpush2.msra.mxu0 0.0
    %405 = vmatprep.subr.mxu0 0.0
    %406 = vmatpush2.msra.mxu0 0.0
    %407 = vmatprep.subr.mxu0 0.0
    %408 = vmatpush2.msra.mxu0 0.0
    %409 = vmatprep.subr.mxu0 0.0
    %410 = vmatpush2.msra.mxu0 0.0
    %411 = vmatprep.subr.mxu0 0.0
    %412 = vmatpush2.msra.mxu0 0.0
    %413 = vmatprep.mubr.f32.mxu0 0.0
    %414 = vmatmul.mubr.f32.gmra.mxu0 %v347
    %v415 = vpop.f32.mrf.mxu0
    %v416 = vadd.f32 0.0, %v415
    %v417 = vpop.f32.mrf.mxu0
    %418 = vdwg.mxu0
    %v419 = vld [vmem:[%s1] sm:$0xff]
    %v420 = vld [vmem:[#allocation4] sm:$0xff]
    %v421 = vld [vmem:[#allocation4 + $0x8] sm:$0xff]
    %v422 = vld [vmem:[#allocation4 + $0x10] sm:$0xff]
    %v423 = vld [vmem:[#allocation4 + $0x18] sm:$0xff]
    %v424 = vld [vmem:[#allocation4 + $0x20] sm:$0xff]
    %v425 = vld [vmem:[#allocation4 + $0x28] sm:$0xff]
    %v426 = vld [vmem:[#allocation4 + $0x30] sm:$0xff]
    %v427 = vld [vmem:[#allocation4 + $0x38] sm:$0xff]
    %v428 = vld [vmem:[#allocation4 + $0x40] sm:$0xff]
    %v429 = vld [vmem:[#allocation4 + $0x48] sm:$0xff]
    %v430 = vld [vmem:[#allocation4 + $0x50] sm:$0xff]
    %v431 = vld [vmem:[#allocation4 + $0x58] sm:$0xff]
    %v432 = vld [vmem:[#allocation4 + $0x60] sm:$0xff]
    %v433 = vld [vmem:[#allocation4 + $0x68] sm:$0xff]
    %v434 = vld [vmem:[#allocation4 + $0x70] sm:$0xff]
    %v435 = vld [vmem:[#allocation4 + $0x78] sm:$0xff]
    %v436 = vld [vmem:[#allocation4 + $0x80] sm:$0xff]
    %v437 = vld [vmem:[#allocation4 + $0x88] sm:$0xff]
    %v438 = vld [vmem:[#allocation4 + $0x90] sm:$0xff]
    %v439 = vld [vmem:[#allocation4 + $0x98] sm:$0xff]
    %v440 = vld [vmem:[#allocation4 + $0xa0] sm:$0xff]
    %v441 = vld [vmem:[#allocation4 + $0xa8] sm:$0xff]
    %v442 = vld [vmem:[#allocation4 + $0xb0] sm:$0xff]
    %v443 = vld [vmem:[#allocation4 + $0xb8] sm:$0xff]
    %v444 = vld [vmem:[#allocation4 + $0xc0] sm:$0xff]
    %v445 = vld [vmem:[#allocation4 + $0xc8] sm:$0xff]
    %v446 = vld [vmem:[#allocation4 + $0xd0] sm:$0xff]
    %v447 = vld [vmem:[#allocation4 + $0xd8] sm:$0xff]
    %v448 = vld [vmem:[#allocation4 + $0xe0] sm:$0xff]
    %v449 = vld [vmem:[#allocation4 + $0xe8] sm:$0xff]
    %v450 = vld [vmem:[#allocation4 + $0xf0] sm:$0xff]
    %v451 = vld [vmem:[#allocation4 + $0xf8] sm:$0xff]
    %v452 = vld [vmem:[#allocation4 + $0x100] sm:$0xff]
    %v453 = vld [vmem:[#allocation4 + $0x108] sm:$0xff]
    %v454 = vld [vmem:[#allocation4 + $0x110] sm:$0xff]
    %v455 = vld [vmem:[#allocation4 + $0x118] sm:$0xff]
    %v456 = vld [vmem:[#allocation4 + $0x120] sm:$0xff]
    %v457 = vld [vmem:[#allocation4 + $0x128] sm:$0xff]
    %v458 = vld [vmem:[#allocation4 + $0x130] sm:$0xff]
    %v459 = vld [vmem:[#allocation4 + $0x138] sm:$0xff]
    %v460 = vld [vmem:[#allocation4 + $0x140] sm:$0xff]
    %v461 = vld [vmem:[#allocation4 + $0x148] sm:$0xff]
    %v462 = vld [vmem:[#allocation4 + $0x150] sm:$0xff]
    %v463 = vld [vmem:[#allocation4 + $0x158] sm:$0xff]
    %v464 = vld [vmem:[#allocation4 + $0x160] sm:$0xff]
    %v465 = vld [vmem:[#allocation4 + $0x168] sm:$0xff]
    %v466 = vld [vmem:[#allocation4 + $0x170] sm:$0xff]
    %v467 = vld [vmem:[#allocation4 + $0x178] sm:$0xff]
    %v468 = vld [vmem:[#allocation4 + $0x180] sm:$0xff]
    %v469 = vld [vmem:[#allocation4 + $0x188] sm:$0xff]
    %v470 = vld [vmem:[#allocation4 + $0x190] sm:$0xff]
    %v471 = vld [vmem:[#allocation4 + $0x198] sm:$0xff]
    %v472 = vld [vmem:[#allocation4 + $0x1a0] sm:$0xff]
    %v473 = vld [vmem:[#allocation4 + $0x1a8] sm:$0xff]
    %v474 = vld [vmem:[#allocation4 + $0x1b0] sm:$0xff]
    %v475 = vld [vmem:[#allocation4 + $0x1b8] sm:$0xff]
    %v476 = vld [vmem:[#allocation4 + $0x1c0] sm:$0xff]
    %v477 = vld [vmem:[#allocation4 + $0x1c8] sm:$0xff]
    %v478 = vld [vmem:[#allocation4 + $0x1d0] sm:$0xff]
    %v479 = vld [vmem:[#allocation4 + $0x1d8] sm:$0xff]
    %v480 = vld [vmem:[#allocation4 + $0x1e0] sm:$0xff]
    %v481 = vld [vmem:[#allocation4 + $0x1e8] sm:$0xff]
    %v482 = vld [vmem:[#allocation4 + $0x1f0] sm:$0xff]
    %v483 = vld [vmem:[#allocation4 + $0x1f8] sm:$0xff]
    %484 = vmatprep.subr.mxu0 %v481
    %485 = vmatpush1.msra.mxu0 %v480
    %486 = vmatprep.subr.mxu0 %v477
    %487 = vmatpush1.msra.mxu0 %v476
    %488 = vmatprep.subr.mxu0 %v473
    %489 = vmatpush1.msra.mxu0 %v472
    %490 = vmatprep.subr.mxu0 %v469
    %491 = vmatpush1.msra.mxu0 %v468
    %492 = vmatprep.subr.mxu0 %v465
    %493 = vmatpush1.msra.mxu0 %v464
    %494 = vmatprep.subr.mxu0 %v461
    %495 = vmatpush1.msra.mxu0 %v460
    %496 = vmatprep.subr.mxu0 %v457
    %497 = vmatpush1.msra.mxu0 %v456
    %498 = vmatprep.subr.mxu0 %v453
    %499 = vmatpush1.msra.mxu0 %v452
    %500 = vmatprep.subr.mxu0 %v449
    %501 = vmatpush1.msra.mxu0 %v448
    %502 = vmatprep.subr.mxu0 %v445
    %503 = vmatpush1.msra.mxu0 %v444
    %504 = vmatprep.subr.mxu0 %v441
    %505 = vmatpush1.msra.mxu0 %v440
    %506 = vmatprep.subr.mxu0 %v437
    %507 = vmatpush1.msra.mxu0 %v436
    %508 = vmatprep.subr.mxu0 %v433
    %509 = vmatpush1.msra.mxu0 %v432
    %510 = vmatprep.subr.mxu0 %v429
    %511 = vmatpush1.msra.mxu0 %v428
    %512 = vmatprep.subr.mxu0 %v425
    %513 = vmatpush1.msra.mxu0 %v424
    %514 = vmatprep.subr.mxu0 %v421
    %515 = vmatpush1.msra.mxu0 %v420
    %516 = vmatprep.subr.mxu0 0.0
    %517 = vmatpush2.msra.mxu0 0.0
    %518 = vmatprep.subr.mxu0 0.0
    %519 = vmatpush2.msra.mxu0 0.0
    %520 = vmatprep.subr.mxu0 0.0
    %521 = vmatpush2.msra.mxu0 0.0
    %522 = vmatprep.subr.mxu0 0.0
    %523 = vmatpush2.msra.mxu0 0.0
    %524 = vmatprep.subr.mxu0 0.0
    %525 = vmatpush2.msra.mxu0 0.0
    %526 = vmatprep.subr.mxu0 0.0
    %527 = vmatpush2.msra.mxu0 0.0
    %528 = vmatprep.subr.mxu0 0.0
    %529 = vmatpush2.msra.mxu0 0.0
    %530 = vmatprep.subr.mxu0 0.0
    %531 = vmatpush2.msra.mxu0 0.0
    %532 = vmatprep.subr.mxu0 0.0
    %533 = vmatpush2.msra.mxu0 0.0
    %534 = vmatprep.subr.mxu0 0.0
    %535 = vmatpush2.msra.mxu0 0.0
    %536 = vmatprep.subr.mxu0 0.0
    %537 = vmatpush2.msra.mxu0 0.0
    %538 = vmatprep.subr.mxu0 0.0
    %539 = vmatpush2.msra.mxu0 0.0
    %540 = vmatprep.subr.mxu0 0.0
    %541 = vmatpush2.msra.mxu0 0.0
    %542 = vmatprep.subr.mxu0 0.0
    %543 = vmatpush2.msra.mxu0 0.0
    %544 = vmatprep.subr.mxu0 0.0
    %545 = vmatpush2.msra.mxu0 0.0
    %546 = vmatprep.subr.mxu0 0.0
    %547 = vmatpush2.msra.mxu0 0.0
    %548 = vmatprep.mubr.f32.mxu0 0.0
    %549 = vmatmul.mubr.f32.gmra.mxu0 %v419
    %v550 = vpop.f32.mrf.mxu0
    %v551 = vadd.f32 0.0, %v550
    %v552 = vpop.f32.mrf.mxu0
    %v553 = vadd.f32 0.0, %v552
    %554 = vdwg.mxu0
    %555 = vmatprep.subr.mxu0 %v483
    %556 = vmatpush1.msra.mxu0 %v482
    %557 = vmatprep.subr.mxu0 %v479
    %558 = vmatpush1.msra.mxu0 %v478
    %559 = vmatprep.subr.mxu0 %v475
    %560 = vmatpush1.msra.mxu0 %v474
    %561 = vmatprep.subr.mxu0 %v471
    %562 = vmatpush1.msra.mxu0 %v470
    %563 = vmatprep.subr.mxu0 %v467
    %564 = vmatpush1.msra.mxu0 %v466
    %565 = vmatprep.subr.mxu0 %v463
    %566 = vmatpush1.msra.mxu0 %v462
    %567 = vmatprep.subr.mxu0 %v459
    %568 = vmatpush1.msra.mxu0 %v458
    %569 = vmatprep.subr.mxu0 %v455
    %570 = vmatpush1.msra.mxu0 %v454
    %571 = vmatprep.subr.mxu0 %v451
    %572 = vmatpush1.msra.mxu0 %v450
    %573 = vmatprep.subr.mxu0 %v447
    %574 = vmatpush1.msra.mxu0 %v446
    %575 = vmatprep.subr.mxu0 %v443
    %576 = vmatpush1.msra.mxu0 %v442
    %577 = vmatprep.subr.mxu0 %v439
    %578 = vmatpush1.msra.mxu0 %v438
    %579 = vmatprep.subr.mxu0 %v435
    %580 = vmatpush1.msra.mxu0 %v434
    %581 = vmatprep.subr.mxu0 %v431
    %582 = vmatpush1.msra.mxu0 %v430
    %583 = vmatprep.subr.mxu0 %v427
    %584 = vmatpush1.msra.mxu0 %v426
    %585 = vmatprep.subr.mxu0 %v423
    %586 = vmatpush1.msra.mxu0 %v422
    %587 = vmatprep.subr.mxu0 0.0
    %588 = vmatpush2.msra.mxu0 0.0
    %589 = vmatprep.subr.mxu0 0.0
    %590 = vmatpush2.msra.mxu0 0.0
    %591 = vmatprep.subr.mxu0 0.0
    %592 = vmatpush2.msra.mxu0 0.0
    %593 = vmatprep.subr.mxu0 0.0
    %594 = vmatpush2.msra.mxu0 0.0
    %595 = vmatprep.subr.mxu0 0.0
    %596 = vmatpush2.msra.mxu0 0.0
    %597 = vmatprep.subr.mxu0 0.0
    %598 = vmatpush2.msra.mxu0 0.0
    %599 = vmatprep.subr.mxu0 0.0
    %600 = vmatpush2.msra.mxu0 0.0
    %601 = vmatprep.subr.mxu0 0.0
    %602 = vmatpush2.msra.mxu0 0.0
    %603 = vmatprep.subr.mxu0 0.0
    %604 = vmatpush2.msra.mxu0 0.0
    %605 = vmatprep.subr.mxu0 0.0
    %606 = vmatpush2.msra.mxu0 0.0
    %607 = vmatprep.subr.mxu0 0.0
    %608 = vmatpush2.msra.mxu0 0.0
    %609 = vmatprep.subr.mxu0 0.0
    %610 = vmatpush2.msra.mxu0 0.0
    %611 = vmatprep.subr.mxu0 0.0
    %612 = vmatpush2.msra.mxu0 0.0
    %613 = vmatprep.subr.mxu0 0.0
    %614 = vmatpush2.msra.mxu0 0.0
    %615 = vmatprep.subr.mxu0 0.0
    %616 = vmatpush2.msra.mxu0 0.0
    %617 = vmatprep.subr.mxu0 0.0
    %618 = vmatpush2.msra.mxu0 0.0
    %619 = vmatprep.mubr.f32.mxu0 0.0
    %620 = vmatmul.mubr.f32.gmra.mxu0 %v419
    %v621 = vpop.f32.mrf.mxu0
    %v622 = vadd.f32 0.0, %v621
    %v623 = vpop.f32.mrf.mxu0
    %v624 = vadd.f32 0.0, %v623
    %625 = vdwg.mxu0
    %v626 = vmul.f32 %v551, %v622
    %v627 = vmul.f32 %v553, %v624
    %629 = vrot.lane.b32.xlu0 %v626, 64
    %v630 = vpop.permute.xlu0 %629
    %v632 = vadd.f32 %v626, %v630
    %v633 = vadd.f32 %v632, %v627
    %635 = vrot.lane.b32.xlu0 %v627, 64
    %v636 = vpop.permute.xlu0 %635
    %v638 = vadd.f32 %v633, %v636
    %v639 = vmul.f32 %v255, %v416
    %v640 = vadd.f32 %v639, %v638
    %642 = vrot.lane.b32.xlu0 %v640, 64
    %v643 = vpop.permute.xlu0 %642
    %v645 = vsub.f32 %v419, %v643
    %v646 = vstv %s55
    %v647 = vmul.f32 %v645, %v646
    %v648 = vmul.f32 %v647, %v647
    %v649 = vmul.f32 %v648, -0.5
    %v650 = vstv %s56
    %v651 = vsub.f32 %v649, %v650
    %v652 = vsel %vm267, %v640, %v651
    %653 = vst [vmem:[#allocation7] sm:$0xff] %v652
    // Predicated region
    $region42: #{tpu_custom_call.1} parent=1 // pred_check
      _
    $region43: #{tpu_custom_call.1} parent=1 // pred_check_branch
      %655 = sbr.rel (0) target = $region45
    $region44: #{tpu_custom_call.1} parent=1 // pred_region
      %s657 = ssub.s32 128, 128
      %658 = vsyncadd [#allocation6], %s657
      %s660 = sshll.u32 [#allocation7], 4
      %s661 = int_to_ptr.vmem [resolvable:$true] %s660
      %663 = dma.vmem_to_hbm [thread:$0]  %s661, 128, %s10, [#allocation6]
    $region45: #{tpu_custom_call.1} parent=1 // pred_fallthru
      _
    // Predicated region
    $region46: #{tpu_custom_call.1} parent=1 // pred_check
      _
    $region47: #{tpu_custom_call.1} parent=1 // pred_check_branch
      %665 = sbr.rel (0) target = $region49
    $region48: #{tpu_custom_call.1} parent=1 // pred_region
      %666 = dma.done [#allocation6], 128
    $region49: #{tpu_custom_call.1} parent=1 // pred_fallthru
      _
    %667 = vsyncpa [#allocation5], 1
    %668 = vsyncpa [#allocation6], 1

</llo_original>
